<compile_context>
chip_gen: v7x
topology: tpu7x:2x2x1
jax: 0.10.0
libtpu: 0.0.40
codegen_flags: <defaults>
</compile_context>

<pallas_src>
import jax
import jax.numpy as jnp
from jax.experimental import pallas as pl
from jax.experimental.pallas import tpu as pltpu

_MIB = 1024 * 1024


def linear_sigmoid_kernel(x_ref, w_ref, b_ref, o_ref):
    # x_ref: (TB, D) VMEM, w_ref: (1, D) VMEM, b_ref: (1,) SMEM, o_ref: (1, TB) VMEM
    prod = x_ref[...] * w_ref[...]                # VPU: (1, D) broadcasts over (TB, D)
    row = jnp.sum(prod, axis=-1)                  # XLU cross-lane reduce -> (TB,)
    y = jax.nn.sigmoid(row + b_ref[0])            # scalar bias from SMEM; exp/recip on EUP
    o_ref[...] = y[None, :].astype(o_ref.dtype)   # lane-dense (1, TB) store


def _vmem_capacity_bytes():
    try:
        info = pltpu.get_tpu_info()
        cap = getattr(info, "vmem_capacity_bytes", None)
        if cap:
            return int(cap)
    except Exception:
        pass
    return 64 * _MIB  # conservative fallback: v7x per-TC physical VMEM


def _round_up(x, m):
    return ((x + m - 1) // m) * m


def _choose_tile_rows(B, D, itemsize):
    """Rows per x tile: largest multiple of 128 whose double-buffered bytes fit the
    VMEM budget; split into >=2 tiles for moderate B so both v7x TCs get work."""
    budget = min(24 * _MIB, _vmem_capacity_bytes() // 2)          # x double-buffer budget
    tb_budget = max(128, (budget // (2 * D * itemsize)) // 128 * 128)
    if B <= tb_budget:
        if B < 1024:
            return B                      # single tile: block dims == full array dims
        # >= 2 grid steps so the "parallel" axis shards across both v7x cores.
        return min(tb_budget, max(128, _round_up(pl.cdiv(B, 2), 128)))
    return tb_budget
    # NOTE: for very large B on v7x, raising buffering depth (pipeline_mode=
    # pl.Buffered(3)) is an alternative to larger tiles; the budget above already
    # lands TB in the 2048-4096 range at D=1024, which covers the same headroom.


def simple_classifier_forward(x, w, b):
    """x: (B, D) f32, w: (1, D) f32 (PyTorch nn.Linear layout), b: (1,) f32."""
    B, D = x.shape
    itemsize = jnp.dtype(x.dtype).itemsize
    TB = _choose_tile_rows(B, D, itemsize)
    n_tiles = pl.cdiv(B, TB)

    # Actual pipeline footprint (double-buffered), plus headroom for compiler scratch.
    x_bytes = 2 * TB * D * itemsize
    w_bytes = 2 * 8 * D * itemsize                 # (1, D) block sublane-pads to 8
    o_bytes = 2 * 8 * _round_up(TB, 128) * 4       # (1, TB) block pads to (8, ceil128)
    vmem_limit = max(32 * _MIB, x_bytes + w_bytes + o_bytes + 4 * _MIB)

    out = pl.pallas_call(
        linear_sigmoid_kernel,
        out_shape=jax.ShapeDtypeStruct((1, B), jnp.float32),
        grid=(n_tiles,),
        in_specs=[
            pl.BlockSpec((TB, D), lambda i: (i, 0)),              # x: tiled over batch
            pl.BlockSpec((1, D), lambda i: (0, 0)),               # w: broadcast to all tiles
            pl.BlockSpec(memory_space=pltpu.MemorySpace.SMEM),    # b: scalar path
        ],
        out_specs=pl.BlockSpec((1, TB), lambda i: (0, i)),        # lane-dense output
        compiler_params=pltpu.CompilerParams(
            dimension_semantics=("parallel",),                    # megacore / v7x sharding
            vmem_limit_bytes=int(vmem_limit),
        ),
        cost_estimate=pl.CostEstimate(
            flops=2 * B * D + B,
            transcendentals=B,
            bytes_accessed=B * D * itemsize + D * itemsize + itemsize + B * 4,
        ),
    )(x, w, b)

    # (1, B) lane-dense -> (B, 1), matching the PyTorch module's output layout.
    return out.reshape(B, 1)


if __name__ == "__main__":
    INPUT_SIZE = 1024
    BATCH = 8

    key = jax.random.PRNGKey(0)
    kx, kw, kb = jax.random.split(key, 3)

    # Deterministic parameter init (mimics nn.Linear uniform(-1/sqrt(D), 1/sqrt(D)))
    bound = 1.0 / (INPUT_SIZE ** 0.5)
    w = jax.random.uniform(kw, (1, INPUT_SIZE), jnp.float32, -bound, bound)
    b = jax.random.uniform(kb, (1,), jnp.float32, -bound, bound)
    x = jax.random.normal(kx, (BATCH, INPUT_SIZE), jnp.float32)

    out = simple_classifier_forward(x, w, b)
    jax.block_until_ready(out)

    # Reference check in plain JAX
    ref = jax.nn.sigmoid(x @ w.T + b)
    assert out.shape == (BATCH, 1)
    assert jnp.allclose(out, ref, atol=1e-5, rtol=1e-5)

    print("KERNEL_OK")
</pallas_src>

<mosaic_0001>
module attributes {stable_mosaic.version = 11 : i64} {
  func.func @linear_sigmoid_kernel(%arg0: i32, %arg1: memref<8x1024xf32, #tpu.memory_space<vmem>>, %arg2: memref<1x1024xf32, #tpu.memory_space<vmem>>, %arg3: memref<1xf32, #tpu.memory_space<smem>>, %arg4: memref<1x8xf32, #tpu.memory_space<vmem>>) attributes {dimension_semantics = [#tpu.dimension_semantics<parallel>], iteration_bounds = array<i64: 1>, scalar_prefetch = 0 : i64, scratch_operands = 0 : i64, tpu.core_type = #tpu.core_type<tc>, window_params = [{transform_indices = @transform_0, window_bounds = array<i64: 8, 1024>}, {pipeline_mode = #tpu.pipeline_mode<synchronous>, transform_indices = @transform_1, window_bounds = array<i64: 1, 1024>}, {transform_indices = @transform_2, window_bounds = array<i64: 1>}, {transform_indices = @transform_3, window_bounds = array<i64: 1, 8>}]} {
    %c0 = arith.constant 0 : index
    %c0_0 = arith.constant 0 : index
    %0 = vector.load %arg1[%c0, %c0_0] : memref<8x1024xf32, #tpu.memory_space<vmem>>, vector<8x1024xf32>
    %c0_1 = arith.constant 0 : index
    %c0_2 = arith.constant 0 : index
    %1 = vector.load %arg2[%c0_1, %c0_2] : memref<1x1024xf32, #tpu.memory_space<vmem>>, vector<1x1024xf32>
    %2 = vector.broadcast %1 : vector<1x1024xf32> to vector<8x1024xf32>
    %3 = arith.mulf %0, %2 : vector<8x1024xf32>
    %cst = arith.constant dense<0.000000e+00> : vector<8xf32>
    %4 = vector.multi_reduction <add>, %3, %cst [1] : vector<8x1024xf32> to vector<8xf32>
    %c0_3 = arith.constant 0 : index
    %5 = memref.load %arg3[%c0_3] : memref<1xf32, #tpu.memory_space<smem>>
    %6 = vector.broadcast %5 : f32 to vector<8xf32>
    %7 = arith.addf %4, %6 : vector<8xf32>
    %8 = arith.negf %7 : vector<8xf32>
    %9 = math.exp %8 : vector<8xf32>
    %cst_4 = arith.constant 1.000000e+00 : f32
    %10 = vector.broadcast %cst_4 : f32 to vector<8xf32>
    %11 = arith.addf %10, %9 : vector<8xf32>
    %12 = arith.divf %10, %11 : vector<8xf32>
    %13 = vector.shape_cast %12 : vector<8xf32> to vector<1x8xf32>
    %c0_5 = arith.constant 0 : index
    %c0_6 = arith.constant 0 : index
    %14 = vector.load %arg4[%c0_5, %c0_6] : memref<1x8xf32, #tpu.memory_space<vmem>>, vector<1x8xf32>
    tpu.vector_store %arg4[%c0_5, %c0_6], %13 {strides = array<i32>} : memref<1x8xf32, #tpu.memory_space<vmem>>, vector<1x8xf32>,
    return
  }
  func.func @transform_0(%arg0: i32) -> (i32, i32) {
    %c0_i32 = arith.constant 0 : i32
    %c0_i32_0 = arith.constant 0 : i32
    return %arg0, %c0_i32 : i32, i32
  }
  func.func @transform_1(%arg0: i32) -> (i32, i32) {
    %c0_i32 = arith.constant 0 : i32
    %c0_i32_0 = arith.constant 0 : i32
    %c0_i32_1 = arith.constant 0 : i32
    return %c0_i32, %c0_i32_0 : i32, i32
  }
  func.func @transform_2(%arg0: i32) -> i32 {
    %c0_i32 = arith.constant 0 : i32
    %c0_i32_0 = arith.constant 0 : i32
    return %c0_i32 : i32
  }
  func.func @transform_3(%arg0: i32) -> (i32, i32) {
    %c0_i32 = arith.constant 0 : i32
    %c0_i32_0 = arith.constant 0 : i32
    return %c0_i32, %arg0 : i32, i32
  }
}

</mosaic_0001>

<llo_original>
// kernel: tpu_custom_call.1
$region0: #{tpu_custom_call.1}
  #allocation0 [shape = 'u32[]', space=smem, size = 0x4, offset = 0x4, fixed_abs, tag = 'smem constant byte address 0x4 - core index']
  #allocation1 [shape = 'u32[144,128]{1,0:T(1,128)}', space=vmem, size = 0x12000, scoped, tag = 'internal scratch']
  #allocation2 [shape = 'f32[1]{0:T(128)S(6)}', space=smem, size = 0x200, scoped, tag = 'scoped memory for tpu_custom_call.1']
  %s0 = inlined_call_operand.hbm [shape: f32[8,1024], index: 0, kind: input, shape index: {}]
  %s1 = inlined_call_operand.hbm [shape: f32[1,1024], index: 1, kind: input, shape index: {}]
  %s2 = inlined_call_operand.<no memory space> [shape: f32[1], index: 2, kind: input, shape index: {}]
  %s3 = inlined_call_operand.hbm [shape: f32[1,8], index: 3, kind: output, shape index: {}]
  %s4 = sld [smem:[#allocation0]]
  $region30: #{tpu_custom_call.1} parent=0
    _
  %s6 = ssub.s32 1, %s4
  %s7 = scalar_select 0, %s6, %s4
  %8 = sst [smem:[#allocation2]] %s2
  $region1: #{tpu_custom_call.1} parent=0
    #allocation3 [shape = 'u8[32768]{0}', space=vmem, size = 0x8000, scoped, tag = 'input window, operand 0, single buffered']
    #allocation4 [shape = 's32[1]{0}', space=sflag, size = 0x4, scoped, tag = 'scoped memory for tpu_custom_call.1']
    #allocation5 [shape = 's32[1]{0}', space=sflag, size = 0x4, scoped, tag = 'scoped memory for tpu_custom_call.1']
    #allocation6 [shape = 'u8[4096]{0}', space=vmem, size = 0x1000, scoped, tag = 'input window, operand 1, single buffered']
    #allocation7 [shape = 's32[1]{0}', space=sflag, size = 0x4, scoped, tag = 'scoped memory for tpu_custom_call.1']
    #allocation8 [shape = 'u8[512]{0}', space=vmem, size = 0x400, scoped, tag = 'output window, operand 0, single buffered']
    %9 = vsyncpa [#allocation4], 0
    %10 = vsyncpa [#allocation7], 0
    %11 = vsyncpa [#allocation5], 0
    // Predicated region
    $region2: #{tpu_custom_call.1} parent=1 // pred_check
      _
    $region3: #{tpu_custom_call.1} parent=1 // pred_check_branch
      %13 = sbr.rel (0) target = $region5
    $region4: #{tpu_custom_call.1} parent=1 // pred_region
      %s15 = ssub.s32 1024, 1024
      %16 = vsyncadd [#allocation4], %s15
      %s18 = sshll.u32 [#allocation3], 4
      %s19 = int_to_ptr.vmem [resolvable:$true] %s18
      %21 = dma.hbm_to_vmem [thread:$0]  %s0, 1024, %s19, [#allocation4]
    $region5: #{tpu_custom_call.1} parent=1 // pred_fallthru
      _
    // Predicated region
    $region6: #{tpu_custom_call.1} parent=1 // pred_check
      _
    $region7: #{tpu_custom_call.1} parent=1 // pred_check_branch
      %23 = sbr.rel (0) target = $region9
    $region8: #{tpu_custom_call.1} parent=1 // pred_region
      %s25 = ssub.s32 128, 128
      %26 = vsyncadd [#allocation7], %s25
      %s28 = sshll.u32 [#allocation6], 4
      %s29 = int_to_ptr.vmem [resolvable:$true] %s28
      %31 = dma.hbm_to_vmem [thread:$0]  %s1, 128, %s29, [#allocation7]
    $region9: #{tpu_custom_call.1} parent=1 // pred_fallthru
      _
    // Predicated region
    $region10: #{tpu_custom_call.1} parent=1 // pred_check
      _
    $region11: #{tpu_custom_call.1} parent=1 // pred_check_branch
      %33 = sbr.rel (0) target = $region13
    $region12: #{tpu_custom_call.1} parent=1 // pred_region
      _
    $region13: #{tpu_custom_call.1} parent=1 // pred_fallthru
      _
    // Predicated region
    $region14: #{tpu_custom_call.1} parent=1 // pred_check
      _
    $region15: #{tpu_custom_call.1} parent=1 // pred_check_branch
      %35 = sbr.rel (0) target = $region17
    $region16: #{tpu_custom_call.1} parent=1 // pred_region
      %36 = dma.done [#allocation4], 1024
    $region17: #{tpu_custom_call.1} parent=1 // pred_fallthru
      _
    // Predicated region
    $region18: #{tpu_custom_call.1} parent=1 // pred_check
      _
    $region19: #{tpu_custom_call.1} parent=1 // pred_check_branch
      %38 = sbr.rel (0) target = $region21
    $region20: #{tpu_custom_call.1} parent=1 // pred_region
      %39 = dma.done [#allocation7], 128
    $region21: #{tpu_custom_call.1} parent=1 // pred_fallthru
      _
    %v40 = vld [vmem:[#allocation3] sm:$0xff]
    %v41 = vld [vmem:[#allocation3 + $0x8] sm:$0xff]
    %v42 = vld [vmem:[#allocation3 + $0x10] sm:$0xff]
    %v43 = vld [vmem:[#allocation3 + $0x18] sm:$0xff]
    %v44 = vld [vmem:[#allocation3 + $0x20] sm:$0xff]
    %v45 = vld [vmem:[#allocation3 + $0x28] sm:$0xff]
    %v46 = vld [vmem:[#allocation3 + $0x30] sm:$0xff]
    %v47 = vld [vmem:[#allocation3 + $0x38] sm:$0xff]
    %v48 = vld [vmem:[#allocation6] sm:$0xff]
    %v50 = vlaneseq
    %v51 = vshrl.u32 %v50, 7
    %v52 = vsub.s32 0, %v51
    %v53 = vrot.slane %v48, %v52
    %v54 = vlaneseq
    %v55 = vshrl.u32 %v54, 7
    %v56 = vsub.s32 1, %v55
    %v57 = vrot.slane %v48, %v56
    %v58 = vlaneseq
    %v59 = vshrl.u32 %v58, 7
    %v60 = vsub.s32 2, %v59
    %v61 = vrot.slane %v48, %v60
    %v62 = vlaneseq
    %v63 = vshrl.u32 %v62, 7
    %v64 = vsub.s32 3, %v63
    %v65 = vrot.slane %v48, %v64
    %v66 = vlaneseq
    %v67 = vshrl.u32 %v66, 7
    %v68 = vsub.s32 4, %v67
    %v69 = vrot.slane %v48, %v68
    %v70 = vlaneseq
    %v71 = vshrl.u32 %v70, 7
    %v72 = vsub.s32 5, %v71
    %v73 = vrot.slane %v48, %v72
    %v74 = vlaneseq
    %v75 = vshrl.u32 %v74, 7
    %v76 = vsub.s32 6, %v75
    %v77 = vrot.slane %v48, %v76
    %v78 = vlaneseq
    %v79 = vshrl.u32 %v78, 7
    %v80 = vsub.s32 7, %v79
    %v81 = vrot.slane %v48, %v80
    %v90 = vmul.f32 %v40, %v53
    %v91 = vmul.f32 %v41, %v57
    %v92 = vmul.f32 %v42, %v61
    %v93 = vmul.f32 %v43, %v65
    %v94 = vmul.f32 %v44, %v69
    %v95 = vmul.f32 %v45, %v73
    %v96 = vmul.f32 %v46, %v77
    %v97 = vmul.f32 %v47, %v81
    %v98 = vadd.f32 %v90, %v91
    %v99 = vadd.f32 %v98, %v92
    %v100 = vadd.f32 %v99, %v93
    %v101 = vadd.f32 %v100, %v94
    %v102 = vadd.f32 %v101, %v95
    %v103 = vadd.f32 %v102, %v96
    %v104 = vadd.f32 %v103, %v97
    %105 = vadd.xlane.f32.xlu0 %v104
    %v106 = vpop.xlane.xlu0 %105
    %s107 = sld [smem:[#allocation2]]
    %v108 = vstv %s107
    %v109 = vadd.f32 %v106, %v108
    %v110 = vxor.u32 %v109, 2147483648
    %v111 = vmul.f32 %v110, 1.442695
    %v112 = vpow.pop %v111
    %v113 = vadd.f32 %v112, 1.0
    %v114 = vrcp.pop %v113
    %v115 = vmul.f32 1.0, %v114
    %v117 = vlaneseq
    %v118 = vand.u32 %v117, 127
    %v119 = vlaneseq
    %v120 = vshrl.u32 %v119, 7
    %v121 = vsub.s32 %v118, %v120
    %v122 = vrot.slane %v115, %v121
    %vm124 = vcmask 57344
    %125 = vst.msk [vmem:[#allocation8] sm:$0x1] %vm124, %v122
    // Predicated region
    $region22: #{tpu_custom_call.1} parent=1 // pred_check
      _
    $region23: #{tpu_custom_call.1} parent=1 // pred_check_branch
      %127 = sbr.rel (0) target = $region25
    $region24: #{tpu_custom_call.1} parent=1 // pred_region
      %s129 = ssub.s32 16, 16
      %130 = vsyncadd [#allocation5], %s129
      %s132 = sshll.u32 [#allocation8], 4
      %s133 = int_to_ptr.vmem [resolvable:$true] %s132
      %135 = dma.vmem_to_hbm [thread:$0]  %s133, 16, %s3, [#allocation5]
    $region25: #{tpu_custom_call.1} parent=1 // pred_fallthru
      _
    // Predicated region
    $region26: #{tpu_custom_call.1} parent=1 // pred_check
      _
    $region27: #{tpu_custom_call.1} parent=1 // pred_check_branch
      %137 = sbr.rel (0) target = $region29
    $region28: #{tpu_custom_call.1} parent=1 // pred_region
      %138 = dma.done [#allocation5], 16
    $region29: #{tpu_custom_call.1} parent=1 // pred_fallthru
      _
    %139 = vsyncpa [#allocation4], 1
    %140 = vsyncpa [#allocation7], 1
    %141 = vsyncpa [#allocation5], 1

</llo_original>
